<compile_context>
chip_gen: v6e
topology: v6e:2x2x1
jax: 0.10.0
libtpu: 0.0.40
codegen_flags: <defaults>
</compile_context>

<pallas_src>
from typing import Any, Optional, Tuple, Union

import jax
import jax.numpy as jnp
from jax.experimental import pallas as pl
from jax.experimental.pallas import tpu as pltpu


# ----------------------------------------------------------------------------
# BaseFlow equivalent (abstract)
# ----------------------------------------------------------------------------
class BaseFlow:
    """JAX/Pallas port of audyn.modules.flow.BaseFlow (abstract flow base)."""

    def forward(
        self,
        *args,
        logdet: Optional[jnp.ndarray] = None,
        reverse: bool = False,
    ) -> Union[Any, Tuple[Any, jnp.ndarray]]:
        # TODO(synk): abstract in the reference module; concrete flows override it.
        raise NotImplementedError(
            f"Implement forward pass of {self.__class__.__name__}."
        )

    def initialize_logdet_if_necessary(
        self,
        logdet: Union[int, float, jnp.ndarray, None] = None,
        device=None,  # kept for signature parity; unused in JAX
    ) -> Union[jnp.ndarray, None]:
        if type(logdet) is int or type(logdet) is float:
            # Perf fix: plain jnp.full — constant-folded / fused by XLA, no
            # pallas_call launch overhead for a 4-byte scalar.
            # TODO(synk): torch.full((), int) would give int64; we keep float32
            # (standard for log-determinants).
            logdet = jnp.full((), logdet, dtype=jnp.float32)
        return logdet


# ----------------------------------------------------------------------------
# Fused Pallas kernel for a concrete flow: per-channel scaling (actnorm-like).
#   z[c]      = x[c] * scale[c]
#   logdet   += H*W * log(scale[c])   (accumulated across the channel grid axis,
#                                      initialized from logdet_in at step 0)
# ----------------------------------------------------------------------------
def _channel_scale_kernel(logdet_in_ref, scale_ref, dlogdet_ref, x_ref,
                          z_ref, logdet_ref):
    c = pl.program_id(0)

    @pl.when(c == 0)
    def _():
        # Fused logdet initialization: one predicated SMEM scalar store,
        # hidden under the first tile's DMA (replaces a standalone kernel).
        logdet_ref[0] = logdet_in_ref[0]

    # x_ref / z_ref: (1, B, H*W) f32 tile in VMEM; scale_ref[c] is a scalar
    # read from SMEM, splatted by the VPU.
    z_ref[...] = x_ref[...] * scale_ref[c]

    # Scalar f32 accumulation in SMEM (dlogdet precomputed per channel).
    logdet_ref[0] = logdet_ref[0] + dlogdet_ref[c]


def _channel_scale_call(logdet_in, scale, dlogdet, x_t):
    """x_t: (C, B, H*W) float32; returns (z_t, logdet_out(1,))."""
    C, B, HW = x_t.shape
    return pl.pallas_call(
        _channel_scale_kernel,
        out_shape=(
            jax.ShapeDtypeStruct((C, B, HW), x_t.dtype),
            jax.ShapeDtypeStruct((1,), jnp.float32),
        ),
        grid=(C,),
        in_specs=[
            pl.BlockSpec(memory_space=pltpu.SMEM),            # logdet_in (1,)
            pl.BlockSpec(memory_space=pltpu.SMEM),            # scale (C,)
            pl.BlockSpec(memory_space=pltpu.SMEM),            # dlogdet (C,)
            pl.BlockSpec((1, B, HW), lambda c: (c, 0, 0)),    # x tile (VMEM)
        ],
        out_specs=(
            pl.BlockSpec((1, B, HW), lambda c: (c, 0, 0)),    # z tile (VMEM)
            # logdet accumulator: same SMEM block across all grid steps.
            pl.BlockSpec((1,), lambda c: (0,), memory_space=pltpu.SMEM),
        ),
        compiler_params=pltpu.CompilerParams(
            # Channel axis carries the logdet accumulator -> reduction axis.
            dimension_semantics=("arbitrary",),
        ),
    )(logdet_in, scale, dlogdet, x_t)


class ChannelScaleFlow(BaseFlow):
    """Minimal concrete flow demonstrating fused logdet init inside the kernel."""

    def __init__(self, log_scale: jnp.ndarray) -> None:
        super().__init__()
        self.log_scale = jnp.asarray(log_scale, dtype=jnp.float32)  # (C,)

    def forward(
        self,
        input: jnp.ndarray,                     # (B, C, H, W)
        logdet: Union[int, float, jnp.ndarray, None] = None,
        reverse: bool = False,
    ) -> Union[jnp.ndarray, Tuple[jnp.ndarray, jnp.ndarray]]:
        logdet = self.initialize_logdet_if_necessary(logdet)
        has_logdet = logdet is not None

        B, C, H, W = input.shape
        HW = H * W
        sign = -1.0 if reverse else 1.0

        # Tiny (C,)-sized precompute in XLA; exp stays out of the scalar path.
        scale = jnp.exp(sign * self.log_scale)                 # (C,)
        dlogdet = (sign * float(HW)) * self.log_scale          # (C,)

        logdet_in = (
            jnp.asarray(logdet, jnp.float32).reshape(1)
            if has_logdet
            else jnp.zeros((1,), jnp.float32)
        )

        # Lane-dense layout: channel -> grid axis, (B, H*W) -> (2, 256) tile.
        x_t = jnp.transpose(input, (1, 0, 2, 3)).reshape(C, B, HW)
        z_t, logdet_out = _channel_scale_call(logdet_in, scale, dlogdet, x_t)
        z = jnp.transpose(z_t.reshape(C, B, H, W), (1, 0, 2, 3))

        if has_logdet:
            return z, logdet_out.reshape(())
        return z


# ----------------------------------------------------------------------------
# Demo / smoke test
# ----------------------------------------------------------------------------
if __name__ == "__main__":
    key = jax.random.PRNGKey(0)
    kx, ks = jax.random.split(key)

    B, C, H, W = 2, 4, 16, 16
    x = jax.random.normal(kx, (B, C, H, W), dtype=jnp.float32)
    log_scale = 0.1 * jax.random.normal(ks, (C,), dtype=jnp.float32)

    flow = ChannelScaleFlow(log_scale)

    # --- Fused kernel: forward with a Python-float logdet (init path fused). ---
    z, logdet = flow.forward(x, logdet=0.0, reverse=False)
    z, logdet = jax.block_until_ready((z, logdet))

    z_ref = x * jnp.exp(log_scale)[None, :, None, None]
    ld_ref = jnp.float32(H * W) * jnp.sum(log_scale)
    assert z.shape == x.shape and logdet.shape == ()
    assert jnp.allclose(z, z_ref, atol=1e-5, rtol=1e-5)
    assert jnp.allclose(logdet, ld_ref, atol=1e-4, rtol=1e-4)

    # --- Reverse round-trip through the same kernel. ---
    x_rec, logdet_rec = flow.forward(z, logdet=logdet, reverse=True)
    x_rec, logdet_rec = jax.block_until_ready((x_rec, logdet_rec))
    assert jnp.allclose(x_rec, x, atol=1e-4, rtol=1e-4)
    assert jnp.allclose(logdet_rec, 0.0, atol=1e-3)

    # --- logdet=None -> output only, no logdet returned. ---
    z_only = flow.forward(x, logdet=None, reverse=False)
    z_only = jax.block_until_ready(z_only)
    assert not isinstance(z_only, tuple)
    assert jnp.allclose(z_only, z_ref, atol=1e-5, rtol=1e-5)

    # --- BaseFlow.initialize_logdet_if_necessary semantics. ---
    base = BaseFlow()
    ld0 = base.initialize_logdet_if_necessary(logdet=1.5)
    assert ld0.shape == () and float(ld0) == 1.5
    ld1 = base.initialize_logdet_if_necessary(logdet=0)
    assert ld1.shape == () and float(ld1) == 0.0
    existing = jnp.float32(3.0)
    assert base.initialize_logdet_if_necessary(logdet=existing) is existing
    assert base.initialize_logdet_if_necessary(logdet=None) is None

    # --- Abstract forward must raise, like the PyTorch base class. ---
    try:
        base.forward(x, logdet=ld0, reverse=False)
        raise AssertionError("forward should have raised NotImplementedError")
    except NotImplementedError:
        pass

    print("KERNEL_OK")
</pallas_src>

<mosaic_0001>
module attributes {stable_mosaic.version = 11 : i64} {
  func.func @_channel_scale_kernel(%arg0: i32, %arg1: memref<1xf32, #tpu.memory_space<smem>>, %arg2: memref<4xf32, #tpu.memory_space<smem>>, %arg3: memref<4xf32, #tpu.memory_space<smem>>, %arg4: memref<1x2x256xf32, #tpu.memory_space<vmem>>, %arg5: memref<1x2x256xf32, #tpu.memory_space<vmem>>, %arg6: memref<1xf32, #tpu.memory_space<smem>>) attributes {dimension_semantics = [#tpu.dimension_semantics<arbitrary>], iteration_bounds = array<i64: 4>, scalar_prefetch = 0 : i64, scratch_operands = 0 : i64, tpu.core_type = #tpu.core_type<tc>, window_params = [{transform_indices = @transform_0, window_bounds = array<i64: 1>}, {transform_indices = @transform_1, window_bounds = array<i64: 4>}, {transform_indices = @transform_2, window_bounds = array<i64: 4>}, {transform_indices = @transform_3, window_bounds = array<i64: 1, 2, 256>}, {transform_indices = @transform_4, window_bounds = array<i64: 1, 2, 256>}, {transform_indices = @transform_5, window_bounds = array<i64: 1>}]} {
    %c0_i32 = arith.constant 0 : i32
    %0 = arith.cmpi eq, %arg0, %c0_i32 : i32
    %1 = arith.extui %0 : i1 to i32
    %c0_i32_0 = arith.constant 0 : i32
    %2 = arith.cmpi ne, %1, %c0_i32_0 : i32
    scf.if %2 {
      %c0_8 = arith.constant 0 : index
      %14 = memref.load %arg1[%c0_8] : memref<1xf32, #tpu.memory_space<smem>>
      %c0_9 = arith.constant 0 : index
      %15 = memref.load %arg6[%c0_9] : memref<1xf32, #tpu.memory_space<smem>>
      memref.store %14, %arg6[%c0_9] : memref<1xf32, #tpu.memory_space<smem>>
    } else {
    }
    %c0 = arith.constant 0 : index
    %c0_1 = arith.constant 0 : index
    %c0_2 = arith.constant 0 : index
    %3 = vector.load %arg4[%c0, %c0_1, %c0_2] : memref<1x2x256xf32, #tpu.memory_space<vmem>>, vector<1x2x256xf32>
    %4 = arith.index_cast %arg0 : i32 to index
    %5 = memref.load %arg2[%4] : memref<4xf32, #tpu.memory_space<smem>>
    %6 = vector.broadcast %5 : f32 to vector<1x2x256xf32>
    %7 = arith.mulf %3, %6 : vector<1x2x256xf32>
    %c0_3 = arith.constant 0 : index
    %c0_4 = arith.constant 0 : index
    %c0_5 = arith.constant 0 : index
    %8 = vector.load %arg5[%c0_3, %c0_4, %c0_5] : memref<1x2x256xf32, #tpu.memory_space<vmem>>, vector<1x2x256xf32>
    tpu.vector_store %arg5[%c0_3, %c0_4, %c0_5], %7 {strides = array<i32>} : memref<1x2x256xf32, #tpu.memory_space<vmem>>, vector<1x2x256xf32>,
    %c0_6 = arith.constant 0 : index
    %9 = memref.load %arg6[%c0_6] : memref<1xf32, #tpu.memory_space<smem>>
    %10 = arith.index_cast %arg0 : i32 to index
    %11 = memref.load %arg3[%10] : memref<4xf32, #tpu.memory_space<smem>>
    %12 = arith.addf %9, %11 : f32
    %c0_7 = arith.constant 0 : index
    %13 = memref.load %arg6[%c0_7] : memref<1xf32, #tpu.memory_space<smem>>
    memref.store %12, %arg6[%c0_7] : memref<1xf32, #tpu.memory_space<smem>>
    return
  }
  func.func @transform_0(%arg0: i32) -> i32 {
    %c0_i32 = arith.constant 0 : i32
    %c0_i32_0 = arith.constant 0 : i32
    return %c0_i32 : i32
  }
  func.func @transform_1(%arg0: i32) -> i32 {
    %c0_i32 = arith.constant 0 : i32
    %c0_i32_0 = arith.constant 0 : i32
    return %c0_i32 : i32
  }
  func.func @transform_2(%arg0: i32) -> i32 {
    %c0_i32 = arith.constant 0 : i32
    %c0_i32_0 = arith.constant 0 : i32
    return %c0_i32 : i32
  }
  func.func @transform_3(%arg0: i32) -> (i32, i32, i32) {
    %c0_i32 = arith.constant 0 : i32
    %c0_i32_0 = arith.constant 0 : i32
    %c0_i32_1 = arith.constant 0 : i32
    return %arg0, %c0_i32, %c0_i32_0 : i32, i32, i32
  }
  func.func @transform_4(%arg0: i32) -> (i32, i32, i32) {
    %c0_i32 = arith.constant 0 : i32
    %c0_i32_0 = arith.constant 0 : i32
    %c0_i32_1 = arith.constant 0 : i32
    return %arg0, %c0_i32, %c0_i32_0 : i32, i32, i32
  }
  func.func @transform_5(%arg0: i32) -> i32 {
    %c0_i32 = arith.constant 0 : i32
    %c0_i32_0 = arith.constant 0 : i32
    return %c0_i32 : i32
  }
}

</mosaic_0001>

<llo_original>
// kernel: tpu_custom_call.1
$region0: #{tpu_custom_call.1}
  #allocation0 [shape = 'u32[]', space=smem, size = 0x4, offset = 0x4, fixed_abs, tag = 'smem constant byte address 0x4 - core index']
  #allocation1 [shape = 'u32[144,128]{1,0:T(1,128)}', space=vmem, size = 0x12000, scoped, tag = 'internal scratch']
  #allocation2 [shape = 'f32[1]{0:T(128)S(6)}', space=smem, size = 0x200, scoped, tag = 'scoped memory for tpu_custom_call.1']
  %s0 = inlined_call_operand.<no memory space> [shape: f32[1], index: 0, kind: input, shape index: {}]
  %s1 = inlined_call_operand.vmem [shape: f32[4], index: 1, kind: input, shape index: {}]
  %s2 = inlined_call_operand.vmem [shape: f32[4], index: 2, kind: input, shape index: {}]
  %s3 = inlined_call_operand.hbm [shape: f32[4,2,256], index: 3, kind: input, shape index: {}]
  %s4 = inlined_call_operand.hbm [shape: f32[4,2,256], index: 4, kind: output, shape index: {0}]
  %s5 = inlined_call_operand.hbm [shape: f32[1], index: 5, kind: output, shape index: {1}]
  %6 = xla_tuple %s4, %s5
  %s7 = sld [smem:[#allocation0]]
  $region73: #{tpu_custom_call.1} parent=0
    _
  %s9 = ssub.s32 1, %s7
  %s10 = scalar_select 0, %s9, %s7
  %11 = sst [smem:[#allocation2]] %s0
  $region1: #{tpu_custom_call.1} parent=0
    #allocation3 [shape = 'u8[512]{0}', space=smem, size = 0x200, scoped, tag = 'input window, operand 1, single buffered']
    #allocation4 [shape = 's32[2]{0}', space=sflag, size = 0x8, scoped, tag = 'scoped memory for tpu_custom_call.1']
    #allocation5 [shape = 's32[2]{0}', space=sflag, size = 0x8, scoped, tag = 'scoped memory for tpu_custom_call.1']
    #allocation6 [shape = 's32[2]{0}', space=sflag, size = 0x8, scoped, tag = 'scoped memory for tpu_custom_call.1']
    #allocation7 [shape = 's32[2]{0}', space=sflag, size = 0x8, scoped, tag = 'scoped memory for tpu_custom_call.1']
    #allocation8 [shape = 'u8[512]{0}', space=smem, size = 0x200, scoped, tag = 'input window, operand 2, single buffered']
    #allocation9 [shape = 's32[1]{0}', space=sflag, size = 0x4, scoped, tag = 'scoped memory for tpu_custom_call.1']
    #allocation10 [shape = 'u8[4096]{0}', space=vmem, size = 0x1000, scoped, tag = 'input window, operand 3']
    #allocation11 [shape = 'u8[4096]{0}', space=vmem, size = 0x1000, scoped, tag = 'output window, operand 0']
    #allocation12 [shape = 'u8[512]{0}', space=smem, size = 0x200, scoped, tag = 'output window, operand 1, single buffered']
    %12 = vsyncpa [#allocation7], 0
    %13 = vsyncpa [#allocation9], 0
    %14 = vsyncpa [#allocation4], 0
    %s15 = scalar_lea.sflag [#allocation4], 1
    %16 = vsyncpa %s15, 0
    %17 = vsyncpa [#allocation5], 0
    %s18 = scalar_lea.sflag [#allocation5], 1
    %19 = vsyncpa %s18, 0
    %20 = vsyncpa [#allocation6], 0
    loop: start=0, step=1, limit=6
    $region2: #{tpu_custom_call.1} parent=1 // loop_pre_header
      _
    $region3: #{tpu_custom_call.1} parent=1 // loop_header
      %s22 = sphi 0, %s26
      %p23 = scmp.ge.s32.totalorder %s22, 6
      %s30 = sphi 0, %s30
      %s32 = sphi 0, %s30
      %s33 = sphi 0, %s32
      %s47 = sphi 0, %s33
      %s51 = sphi 0, %s51
      %s53 = sphi 0, %s51
      %s54 = sphi 0, %s53
      %s68 = sphi 0, %s54
      %s72 = sphi 0, %s72
      %s74 = sphi 0, %s72
      %s75 = sphi 0, %s74
      %s89 = sphi 0, %s75
      %s95 = sphi 0, %s97
      %s98 = sphi 0, %s95
      %s99 = sphi 0, %s98
      %s115 = sphi 0, %s99
      %s121 = sphi 0, %s123
      %s124 = sphi 0, %s121
      %s125 = sphi 0, %s124
      %s141 = sphi 0, %s125
      %s145 = sphi 0, %s145
      %s147 = sphi 0, %s145
      %s148 = sphi 0, %s147
      %s162 = sphi 0, %s148
    $region4: #{tpu_custom_call.1} parent=1 // loop_header_branch
      %25 = sbr.rel (%p23) target = $region8
    $region5: #{tpu_custom_call.1} parent=1 // loop_body
      %s27 = ssub.s32 %s22, 1
      %s28 = ssub.s32 %s22, 2
      %s29 = sadd.s32 %s22, 1
      %s31 = sadd.s32 %s30, 1
      %p34 = scmp.eq.s32.totalorder %s22, 3
      %p35 = scmp.ne.s32.totalorder %s30, %s32
      %p36 = scmp.eq.s32.totalorder %s22, 0
      %p37 = por %p35, %p36
      %p38 = scmp.ne.s32.totalorder %s30, %s32
      %p39 = scmp.eq.s32.totalorder %s27, 3
      %p40 = por %p38, %p39
      %p41 = scmp.ne.s32.totalorder %s32, %s33
      %p42 = scmp.eq.s32.totalorder %s27, 0
      %p43 = por %p41, %p42
      %p44 = scmp.ne.s32.totalorder %s32, %s33
      %p45 = scmp.eq.s32.totalorder %s28, 3
      %p46 = por %p44, %p45
      %p48 = scmp.ne.s32.totalorder %s33, %s47
      %p49 = scmp.eq.s32.totalorder %s28, 0
      %p50 = por %p48, %p49
      %s52 = sadd.s32 %s51, 1
      %p55 = scmp.eq.s32.totalorder %s22, 3
      %p56 = scmp.ne.s32.totalorder %s51, %s53
      %p57 = scmp.eq.s32.totalorder %s22, 0
      %p58 = por %p56, %p57
      %p59 = scmp.ne.s32.totalorder %s51, %s53
      %p60 = scmp.eq.s32.totalorder %s27, 3
      %p61 = por %p59, %p60
      %p62 = scmp.ne.s32.totalorder %s53, %s54
      %p63 = scmp.eq.s32.totalorder %s27, 0
      %p64 = por %p62, %p63
      %p65 = scmp.ne.s32.totalorder %s53, %s54
      %p66 = scmp.eq.s32.totalorder %s28, 3
      %p67 = por %p65, %p66
      %p69 = scmp.ne.s32.totalorder %s54, %s68
      %p70 = scmp.eq.s32.totalorder %s28, 0
      %p71 = por %p69, %p70
      %s73 = sadd.s32 %s72, 1
      %p76 = scmp.eq.s32.totalorder %s22, 3
      %p77 = scmp.ne.s32.totalorder %s72, %s74
      %p78 = scmp.eq.s32.totalorder %s22, 0
      %p79 = por %p77, %p78
      %p80 = scmp.ne.s32.totalorder %s72, %s74
      %p81 = scmp.eq.s32.totalorder %s27, 3
      %p82 = por %p80, %p81
      %p83 = scmp.ne.s32.totalorder %s74, %s75
      %p84 = scmp.eq.s32.totalorder %s27, 0
      %p85 = por %p83, %p84
      %p86 = scmp.ne.s32.totalorder %s74, %s75
      %p87 = scmp.eq.s32.totalorder %s28, 3
      %p88 = por %p86, %p87
      %p90 = scmp.ne.s32.totalorder %s75, %s89
      %p91 = scmp.eq.s32.totalorder %s28, 0
      %p92 = por %p90, %p91
      %s93 = ssub.s32 %s22, %s29
      %p94 = scmp.eq.s32.totalorder %s93, 0
      %s96 = sadd.s32 %s95, 1
      %s97 = scalar_select %p94, %s95, %s96
      %p100 = pneg %p94
      %p101 = scmp.eq.s32.totalorder %s22, 3
      %p102 = por %p100, %p101
      %p103 = scmp.ne.s32.totalorder %s95, %s98
      %p104 = scmp.eq.s32.totalorder %s22, 0
      %p105 = por %p103, %p104
      %p106 = scmp.ne.s32.totalorder %s95, %s98
      %p107 = scmp.eq.s32.totalorder %s27, 3
      %p108 = por %p106, %p107
      %p109 = scmp.ne.s32.totalorder %s98, %s99
      %p110 = scmp.eq.s32.totalorder %s27, 0
      %p111 = por %p109, %p110
      %p112 = scmp.ne.s32.totalorder %s98, %s99
      %p113 = scmp.eq.s32.totalorder %s28, 3
      %p114 = por %p112, %p113
      %p116 = scmp.ne.s32.totalorder %s99, %s115
      %p117 = scmp.eq.s32.totalorder %s28, 0
      %p118 = por %p116, %p117
      %s119 = ssub.s32 %s22, %s29
      %p120 = scmp.eq.s32.totalorder %s119, 0
      %s122 = sadd.s32 %s121, 1
      %s123 = scalar_select %p120, %s121, %s122
      %p126 = pneg %p120
      %p127 = scmp.eq.s32.totalorder %s22, 3
      %p128 = por %p126, %p127
      %p129 = scmp.ne.s32.totalorder %s121, %s124
      %p130 = scmp.eq.s32.totalorder %s22, 0
      %p131 = por %p129, %p130
      %p132 = scmp.ne.s32.totalorder %s121, %s124
      %p133 = scmp.eq.s32.totalorder %s27, 3
      %p134 = por %p132, %p133
      %p135 = scmp.ne.s32.totalorder %s124, %s125
      %p136 = scmp.eq.s32.totalorder %s27, 0
      %p137 = por %p135, %p136
      %p138 = scmp.ne.s32.totalorder %s124, %s125
      %p139 = scmp.eq.s32.totalorder %s28, 3
      %p140 = por %p138, %p139
      %p142 = scmp.ne.s32.totalorder %s125, %s141
      %p143 = scmp.eq.s32.totalorder %s28, 0
      %p144 = por %p142, %p143
      %s146 = sadd.s32 %s145, 1
      %p149 = scmp.eq.s32.totalorder %s22, 3
      %p150 = scmp.ne.s32.totalorder %s145, %s147
      %p151 = scmp.eq.s32.totalorder %s22, 0
      %p152 = por %p150, %p151
      %p153 = scmp.ne.s32.totalorder %s145, %s147
      %p154 = scmp.eq.s32.totalorder %s27, 3
      %p155 = por %p153, %p154
      %p156 = scmp.ne.s32.totalorder %s147, %s148
      %p157 = scmp.eq.s32.totalorder %s27, 0
      %p158 = por %p156, %p157
      %p159 = scmp.ne.s32.totalorder %s147, %s148
      %p160 = scmp.eq.s32.totalorder %s28, 3
      %p161 = por %p159, %p160
      %p163 = scmp.ne.s32.totalorder %s148, %s162
      %p164 = scmp.eq.s32.totalorder %s28, 0
      %p165 = por %p163, %p164
      %p166 = scmp.le.s32.totalorder 1, %s22
      %p167 = scmp.lt.s32.totalorder %s22, 5
      %p168 = pnand %p166, %p167
      %p169 = pneg %p168
      // Predicated region
      $region9: #{tpu_custom_call.1} parent=5 // pred_check
        _
      $region10: #{tpu_custom_call.1} parent=5 // pred_check_branch
        %171 = sbr.rel (%p168) target = $region12
      $region11: #{tpu_custom_call.1} parent=5 // pred_region
        %s172 = ssub.s32 %s22, 1
        // Predicated region
        $region13: #{tpu_custom_call.1} parent=11 // pred_check
          %p173 = pneg %p43
        $region14: #{tpu_custom_call.1} parent=11 // pred_check_branch
          %175 = sbr.rel (%p173) target = $region16
        $region15: #{tpu_custom_call.1} parent=11 // pred_region
          _
        $region16: #{tpu_custom_call.1} parent=11 // pred_fallthru
          _
        // Predicated region
        $region17: #{tpu_custom_call.1} parent=11 // pred_check
          %p176 = pneg %p64
        $region18: #{tpu_custom_call.1} parent=11 // pred_check_branch
          %178 = sbr.rel (%p176) target = $region20
        $region19: #{tpu_custom_call.1} parent=11 // pred_region
          %s180 = ssub.s32 16, 16
          %181 = vsyncadd [#allocation7], %s180
          %s183 = sshll.u32 %s1, 4
          %s184 = int_to_ptr.vmem [resolvable:$true] %s183
          %186 = dma.vmem_to_smem %s184, 16, [#allocation3], [#allocation7]
        $region20: #{tpu_custom_call.1} parent=11 // pred_fallthru
          _
        // Predicated region
        $region21: #{tpu_custom_call.1} parent=11 // pred_check
          %p187 = pneg %p85
        $region22: #{tpu_custom_call.1} parent=11 // pred_check_branch
          %189 = sbr.rel (%p187) target = $region24
        $region23: #{tpu_custom_call.1} parent=11 // pred_region
          %s191 = ssub.s32 16, 16
          %192 = vsyncadd [#allocation9], %s191
          %s194 = sshll.u32 %s2, 4
          %s195 = int_to_ptr.vmem [resolvable:$true] %s194
          %197 = dma.vmem_to_smem %s195, 16, [#allocation8], [#allocation9]
        $region24: #{tpu_custom_call.1} parent=11 // pred_fallthru
          _
      $region12: #{tpu_custom_call.1} parent=5 // pred_fallthru
        _
      %p198 = scmp.lt.s32.totalorder %s22, 4
      // Predicated region
      $region25: #{tpu_custom_call.1} parent=5 // pred_check
        %p199 = pneg %p198
      $region26: #{tpu_custom_call.1} parent=5 // pred_check_branch
        %201 = sbr.rel (%p199) target = $region28
      $region27: #{tpu_custom_call.1} parent=5 // pred_region
        // Predicated region
        $region29: #{tpu_custom_call.1} parent=27 // pred_check
          %p202 = pneg %p105
        $region30: #{tpu_custom_call.1} parent=27 // pred_check_branch
          %204 = sbr.rel (%p202) target = $region32
        $region31: #{tpu_custom_call.1} parent=27 // pred_region
          %s205 = sand.u32 %s95, 1
          %s206 = scalar_lea.sflag [#allocation4], %s205
          %s207 = sand.u32 %s95, 1
          %s208 = smul.addr %s207, 4
          %s209 = scalar_lea.vmem [#allocation10], %s208
          %s211 = ssub.s32 64, 64
          %212 = vsyncadd %s206, %s211
          %s213 = smul.addr %s22, 2
          %s214 = smul.addr %s213, 32
          %s215 = scalar_lea.hbm %s3, %s214
          %s217 = sshll.u32 %s209, 4
          %s218 = int_to_ptr.vmem [resolvable:$true] %s217
          %220 = dma.hbm_to_vmem [thread:$0]  %s215, 64, %s218, %s206
        $region32: #{tpu_custom_call.1} parent=27 // pred_fallthru
          _
      $region28: #{tpu_custom_call.1} parent=5 // pred_fallthru
        _
      %p221 = scmp.le.s32.totalorder 1, %s22
      %p222 = scmp.lt.s32.totalorder %s22, 5
      %p223 = pnand %p221, %p222
      %p224 = pneg %p223
      // Predicated region
      $region33: #{tpu_custom_call.1} parent=5 // pred_check
        _
      $region34: #{tpu_custom_call.1} parent=5 // pred_check_branch
        %226 = sbr.rel (%p223) target = $region36
      $region35: #{tpu_custom_call.1} parent=5 // pred_region
        %s227 = ssub.s32 %s22, 1
        // Predicated region
        $region37: #{tpu_custom_call.1} parent=35 // pred_check
          %p228 = pneg %p64
        $region38: #{tpu_custom_call.1} parent=35 // pred_check_branch
          %230 = sbr.rel (%p228) target = $region40
        $region39: #{tpu_custom_call.1} parent=35 // pred_region
          %231 = dma.done [#allocation7], 16
        $region40: #{tpu_custom_call.1} parent=35 // pred_fallthru
          _
        // Predicated region
        $region41: #{tpu_custom_call.1} parent=35 // pred_check
          %p232 = pneg %p85
        $region42: #{tpu_custom_call.1} parent=35 // pred_check_branch
          %234 = sbr.rel (%p232) target = $region44
        $region43: #{tpu_custom_call.1} parent=35 // pred_region
          %235 = dma.done [#allocation9], 16
        $region44: #{tpu_custom_call.1} parent=35 // pred_fallthru
          _
        %s236 = sand.u32 %s98, 1
        %s237 = scalar_lea.sflag [#allocation4], %s236
        %s238 = sand.u32 %s98, 1
        %s239 = smul.addr %s238, 4
        %s240 = scalar_lea.vmem [#allocation10], %s239
        // Predicated region
        $region45: #{tpu_custom_call.1} parent=35 // pred_check
          %p241 = pneg %p111
        $region46: #{tpu_custom_call.1} parent=35 // pred_check_branch
          %243 = sbr.rel (%p241) target = $region48
        $region47: #{tpu_custom_call.1} parent=35 // pred_region
          %244 = dma.done %s237, 64
        $region48: #{tpu_custom_call.1} parent=35 // pred_fallthru
          _
        %245 = sfence
        %p246 = pneg %p43
        %p247 = pneg %p40
        %p248 = pneg %p64
        %p249 = pneg %p61
        %p250 = pneg %p85
        %p251 = pneg %p82
        %s252 = sand.u32 %s98, 1
        %s253 = scalar_lea.sflag [#allocation4], %s252
        %s254 = sand.u32 %s98, 1
        %s255 = smul.addr %s254, 4
        %s256 = scalar_lea.vmem [#allocation10], %s255
        %p257 = pneg %p111
        %p258 = pneg %p108
        %p259 = pneg %p137
        %p260 = pneg %p134
        %s261 = sand.u32 %s124, 1
        %s262 = scalar_lea.sflag [#allocation5], %s261
        %s263 = sand.u32 %s124, 1
        %s264 = smul.addr %s263, 4
        %s265 = scalar_lea.vmem [#allocation11], %s264
        %p266 = pneg %p158
        %p267 = pneg %p155
        %p268 = scmp.eq.s32.totalorder %s27, 0
        // Predicated region
        $region49: #{tpu_custom_call.1} parent=35 // pred_check
          %p269 = pneg %p268
        $region50: #{tpu_custom_call.1} parent=35 // pred_check_branch
          %271 = sbr.rel (%p269) target = $region52
        $region51: #{tpu_custom_call.1} parent=35 // pred_region
          %s272 = sld [smem:[#allocation2]]
          %s273 = scalar_lea.smem [#allocation12], 0
          %274 = sst [smem:[%s273]] %s272
        $region52: #{tpu_custom_call.1} parent=35 // pred_fallthru
          _
        %v275 = vld [vmem:[%s240] sm:$0xf]
        %s276 = sld [smem:[#allocation3 + %s27]]
        %v277 = vstv %s276
        %v278 = vmul.f32 %v275, %v277
        %279 = vst [vmem:[%s265] sm:$0xf] %v278
        %s280 = sld [smem:[#allocation12]]
        %s281 = sld [smem:[#allocation8 + %s27]]
        %s282 = sadd.f32 %s280, %s281
        %s283 = scalar_lea.smem [#allocation12], 0
        %284 = sst [smem:[%s283]] %s282
        %s285 = sand.u32 %s124, 1
        %s286 = scalar_lea.sflag [#allocation5], %s285
        %s287 = sand.u32 %s124, 1
        %s288 = smul.addr %s287, 4
        %s289 = scalar_lea.vmem [#allocation11], %s288
        // Predicated region
        $region53: #{tpu_custom_call.1} parent=35 // pred_check
          %p290 = pneg %p134
        $region54: #{tpu_custom_call.1} parent=35 // pred_check_branch
          %292 = sbr.rel (%p290) target = $region56
        $region55: #{tpu_custom_call.1} parent=35 // pred_region
          %s294 = ssub.s32 64, 64
          %295 = vsyncadd %s286, %s294
          %s296 = smul.addr %s27, 2
          %s297 = smul.addr %s296, 32
          %s298 = scalar_lea.hbm %s4, %s297
          %s300 = sshll.u32 %s289, 4
          %s301 = int_to_ptr.vmem [resolvable:$true] %s300
          %303 = dma.vmem_to_hbm [thread:$0]  %s301, 64, %s298, %s286
        $region56: #{tpu_custom_call.1} parent=35 // pred_fallthru
          _
        // Predicated region
        $region57: #{tpu_custom_call.1} parent=35 // pred_check
          %p304 = pneg %p155
        $region58: #{tpu_custom_call.1} parent=35 // pred_check_branch
          %306 = sbr.rel (%p304) target = $region60
        $region59: #{tpu_custom_call.1} parent=35 // pred_region
          %s308 = ssub.s32 16, 16
          %309 = vsyncadd [#allocation6], %s308
          %312 = dma.smem_to_hbm [#allocation12], 16, %s5, [#allocation6]
        $region60: #{tpu_custom_call.1} parent=35 // pred_fallthru
          _
        // Predicated region
        $region61: #{tpu_custom_call.1} parent=35 // pred_check
          %p313 = pneg %p155
        $region62: #{tpu_custom_call.1} parent=35 // pred_check_branch
          %315 = sbr.rel (%p313) target = $region64
        $region63: #{tpu_custom_call.1} parent=35 // pred_region
          %316 = dma.done [#allocation6], 16
        $region64: #{tpu_custom_call.1} parent=35 // pred_fallthru
          _
        %317 = sfence
      $region36: #{tpu_custom_call.1} parent=5 // pred_fallthru
        _
      %p318 = scmp.le.s32.totalorder 2, %s22
      // Predicated region
      $region65: #{tpu_custom_call.1} parent=5 // pred_check
        %p319 = pneg %p318
      $region66: #{tpu_custom_call.1} parent=5 // pred_check_branch
        %321 = sbr.rel (%p319) target = $region68
      $region67: #{tpu_custom_call.1} parent=5 // pred_region
        %s322 = ssub.s32 %s22, 2
        // Predicated region
        $region69: #{tpu_custom_call.1} parent=67 // pred_check
          %p323 = pneg %p140
        $region70: #{tpu_custom_call.1} parent=67 // pred_check_branch
          %325 = sbr.rel (%p323) target = $region72
        $region71: #{tpu_custom_call.1} parent=67 // pred_region
          %s326 = sand.u32 %s125, 1
          %s327 = scalar_lea.sflag [#allocation5], %s326
          %s328 = sand.u32 %s125, 1
          %s329 = smul.addr %s328, 4
          %s330 = scalar_lea.vmem [#allocation11], %s329
          %331 = dma.done %s327, 64
        $region72: #{tpu_custom_call.1} parent=67 // pred_fallthru
          _
      $region68: #{tpu_custom_call.1} parent=5 // pred_fallthru
        _
    $region6: #{tpu_custom_call.1} parent=1 // loop_footer
      %s26 = sadd.s32 1, %s22
    $region7: #{tpu_custom_call.1} parent=1 // loop_footer_branch
      %21 = sbr.rel target = $region3
    $region8: #{tpu_custom_call.1} parent=1 // loop_exit
      _
    %332 = vsyncpa [#allocation4], 1
    %s333 = scalar_lea.sflag [#allocation4], 1
    %334 = vsyncpa %s333, 1
    %335 = vsyncpa [#allocation5], 1
    %s336 = scalar_lea.sflag [#allocation5], 1
    %337 = vsyncpa %s336, 1
    %338 = vsyncpa [#allocation6], 1
    %s339 = scalar_lea.sflag [#allocation6], 1
    %340 = vsyncpa %s339, 1
    %341 = vsyncpa [#allocation7], 1
    %s342 = scalar_lea.sflag [#allocation7], 1
    %343 = vsyncpa %s342, 1
    %344 = vsyncpa [#allocation9], 1

</llo_original>
